<compile_context>
chip_gen: v7x
topology: tpu7x:2x2x1
jax: 0.10.0
libtpu: 0.0.40
codegen_flags: <defaults>
</compile_context>

<pallas_src>
import functools

import jax
import jax.numpy as jnp
from jax.experimental import pallas as pl
from jax.experimental.pallas import tpu as pltpu


def _round_up(x, m):
    return ((x + m - 1) // m) * m


def _dyn_loss_kernel(s0_ref, s1_ref, a_ref,
                     ws0_ref, wa_ref, ws1_ref, b1_ref, w2_ref, b2_ref,
                     out_f_ref, out_b_ref, *, dim_state):
    s0 = s0_ref[...]          # (TILE_N, S)
    s1 = s1_ref[...]          # (TILE_N, S)
    a = a_ref[...]            # (TILE_N, A)

    # Fused first layer: hidden = [fwd_hidden | bwd_hidden]  -> (TILE_N, 2H)
    pre = (jnp.dot(s0, ws0_ref[...], preferred_element_type=jnp.float32)
           + jnp.dot(a, wa_ref[...], preferred_element_type=jnp.float32)
           + jnp.dot(s1, ws1_ref[...], preferred_element_type=jnp.float32)
           + b1_ref[...])
    h = jnp.tanh(pre)

    # Fused block-diagonal second layer: pred = [s1_pred | a_pred] -> (TILE_N, S+A)
    pred = jnp.dot(h, w2_ref[...], preferred_element_type=jnp.float32) + b2_ref[...]

    err_f = pred[:, :dim_state] - s1
    err_b = pred[:, dim_state:] - a

    # Per-row sums of squared error; normalization happens once in the wrapper.
    out_f_ref[...] = jnp.sum(err_f * err_f, axis=1, keepdims=True)
    out_b_ref[...] = jnp.sum(err_b * err_b, axis=1, keepdims=True)


def _linear_params(key, fan_in, fan_out):
    # Deterministic init mimicking nn.Linear default (uniform +-1/sqrt(fan_in)).
    kw, kb = jax.random.split(key)
    bound = 1.0 / jnp.sqrt(jnp.float32(fan_in))
    w = jax.random.uniform(kw, (fan_in, fan_out), jnp.float32, -bound, bound)
    b = jax.random.uniform(kb, (1, fan_out), jnp.float32, -bound, bound)
    return w, b


def make_params(key, dim_state, dim_act, dim_hidden):
    # Single hidden layer (dim_hidden is one int here), act='tanh', no BN.
    k1, k2, k3, k4 = jax.random.split(key, 4)
    wf1, bf1 = _linear_params(k1, dim_state + dim_act, dim_hidden)
    wf2, bf2 = _linear_params(k2, dim_hidden, dim_state)
    wb1, bb1 = _linear_params(k3, dim_state + dim_state, dim_hidden)
    wb2, bb2 = _linear_params(k4, dim_hidden, dim_act)
    return dict(wf1=wf1, bf1=bf1, wf2=wf2, bf2=bf2,
                wb1=wb1, bb1=bb1, wb2=wb2, bb2=bb2)


def _pack_params(params, S, A, H):
    """One-time block-column / block-diagonal weight packing."""
    f32 = jnp.float32
    # First layer, split by input group, fwd columns [0:H], bwd columns [H:2H].
    ws0 = jnp.concatenate([params['wf1'][:S], params['wb1'][:S]], axis=1)      # (S, 2H)
    wa = jnp.concatenate([params['wf1'][S:], jnp.zeros((A, H), f32)], axis=1)  # (A, 2H)
    ws1 = jnp.concatenate([jnp.zeros((S, H), f32), params['wb1'][S:]], axis=1)  # (S, 2H)
    b1 = jnp.concatenate([params['bf1'], params['bb1']], axis=1)               # (1, 2H)
    # Second layer, block-diagonal (2H, S+A).
    w2 = jnp.concatenate(
        [jnp.concatenate([params['wf2'], jnp.zeros((H, A), f32)], axis=1),
         jnp.concatenate([jnp.zeros((H, S), f32), params['wb2']], axis=1)],
        axis=0)
    b2 = jnp.concatenate([params['bf2'], params['bb2']], axis=1)               # (1, S+A)
    return ws0, wa, ws1, b1, w2, b2


def mlp_fwd_bwd_dyn_loss(states, actions, params, *, tile_n=512):
    """states: (B, T, S) f32, actions: (B, T, A) f32 -> scalar loss (f32)."""
    B, T, S = states.shape
    A = actions.shape[-1]
    H = params['wf1'].shape[1]
    N = B * (T - 1)

    # Glue: slicing / flattening only — NO activation concatenation here.
    s0 = states[:, :-1].reshape(N, S)
    s1 = states[:, 1:].reshape(N, S)
    a = actions[:, :-1].reshape(N, A)

    # Row tiling: pad N up to a multiple of tile_n; padded rows are dropped
    # in the wrapper before the final reduction, so no in-kernel masking.
    tile_n = min(tile_n, _round_up(N, 8))
    n_pad = _round_up(N, tile_n)
    if n_pad != N:
        pad = n_pad - N
        s0 = jnp.pad(s0, ((0, pad), (0, 0)))
        s1 = jnp.pad(s1, ((0, pad), (0, 0)))
        a = jnp.pad(a, ((0, pad), (0, 0)))

    ws0, wa, ws1, b1, w2, b2 = _pack_params(params, S, A, H)

    row_map = lambda i: (i, 0)
    full_map = lambda i: (0, 0)
    row_spec_s = pl.BlockSpec((tile_n, S), row_map)
    row_spec_a = pl.BlockSpec((tile_n, A), row_map)
    out_spec = pl.BlockSpec((tile_n, 1), row_map)

    def full_spec(shape):
        return pl.BlockSpec(shape, full_map)   # VMEM-resident across the grid

    kernel = functools.partial(_dyn_loss_kernel, dim_state=S)

    fwd_sq, bwd_sq = pl.pallas_call(
        kernel,
        out_shape=(jax.ShapeDtypeStruct((n_pad, 1), jnp.float32),
                   jax.ShapeDtypeStruct((n_pad, 1), jnp.float32)),
        grid_spec=pltpu.PrefetchScalarGridSpec(
            num_scalar_prefetch=0,
            grid=(n_pad // tile_n,),
            in_specs=[row_spec_s, row_spec_s, row_spec_a,
                      full_spec((S, 2 * H)), full_spec((A, 2 * H)),
                      full_spec((S, 2 * H)), full_spec((1, 2 * H)),
                      full_spec((2 * H, S + A)), full_spec((1, S + A))],
            out_specs=[out_spec, out_spec]),
        compiler_params=pltpu.CompilerParams(
            dimension_semantics=("parallel",)),
    )(s0, s1, a, ws0, wa, ws1, b1, w2, b2)

    # Tiny final reduction + mean normalization (once, not per tile).
    loss = (jnp.sum(fwd_sq[:N, 0]) / (N * S)
            + jnp.sum(bwd_sq[:N, 0]) / (N * A))
    return loss


def _reference(states, actions, params):
    B, T, S = states.shape
    A = actions.shape[-1]
    N = B * (T - 1)
    s0 = states[:, :-1].reshape(N, S)
    s1 = states[:, 1:].reshape(N, S)
    a = actions[:, :-1].reshape(N, A)
    hf = jnp.tanh(jnp.concatenate([s0, a], -1) @ params['wf1'] + params['bf1'])
    s1_pred = hf @ params['wf2'] + params['bf2']
    hb = jnp.tanh(jnp.concatenate([s0, s1], -1) @ params['wb1'] + params['bb1'])
    a_pred = hb @ params['wb2'] + params['bb2']
    return jnp.mean((s1_pred - s1) ** 2) + jnp.mean((a_pred - a) ** 2)


if __name__ == "__main__":
    # Small config consistent with the module: dim_state=8, dim_act=4,
    # dim_hidden=(32,), act='tanh', use_bn=False. Batch=2, seq len T=9.
    B, T, S, A, H = 2, 9, 8, 4, 32

    key = jax.random.PRNGKey(0)
    k_states, k_actions, k_params = jax.random.split(key, 3)
    states = jax.random.normal(k_states, (B, T, S), jnp.float32)
    actions = jax.random.normal(k_actions, (B, T, A), jnp.float32)
    params = make_params(k_params, S, A, H)

    loss = jax.jit(mlp_fwd_bwd_dyn_loss)(states, actions, params)
    loss = jax.block_until_ready(loss)

    ref = _reference(states, actions, params)
    assert jnp.allclose(loss, ref, rtol=1e-5, atol=1e-5), (loss, ref)

    print("KERNEL_OK")
</pallas_src>

<mosaic_0001>
module attributes {stable_mosaic.version = 11 : i64} {
  func.func @_dyn_loss_kernel(%arg0: i32, %arg1: memref<16x8xf32, #tpu.memory_space<vmem>>, %arg2: memref<16x8xf32, #tpu.memory_space<vmem>>, %arg3: memref<16x4xf32, #tpu.memory_space<vmem>>, %arg4: memref<8x64xf32, #tpu.memory_space<vmem>>, %arg5: memref<4x64xf32, #tpu.memory_space<vmem>>, %arg6: memref<8x64xf32, #tpu.memory_space<vmem>>, %arg7: memref<1x64xf32, #tpu.memory_space<vmem>>, %arg8: memref<64x12xf32, #tpu.memory_space<vmem>>, %arg9: memref<1x12xf32, #tpu.memory_space<vmem>>, %arg10: memref<16x1xf32, #tpu.memory_space<vmem>>, %arg11: memref<16x1xf32, #tpu.memory_space<vmem>>) attributes {dimension_semantics = [#tpu.dimension_semantics<parallel>], iteration_bounds = array<i64: 1>, scalar_prefetch = 0 : i64, scratch_operands = 0 : i64, tpu.core_type = #tpu.core_type<tc>, window_params = [{transform_indices = @transform_0, window_bounds = array<i64: 16, 8>}, {transform_indices = @transform_1, window_bounds = array<i64: 16, 8>}, {transform_indices = @transform_2, window_bounds = array<i64: 16, 4>}, {pipeline_mode = #tpu.pipeline_mode<synchronous>, transform_indices = @transform_3, window_bounds = array<i64: 8, 64>}, {pipeline_mode = #tpu.pipeline_mode<synchronous>, transform_indices = @transform_4, window_bounds = array<i64: 4, 64>}, {pipeline_mode = #tpu.pipeline_mode<synchronous>, transform_indices = @transform_5, window_bounds = array<i64: 8, 64>}, {pipeline_mode = #tpu.pipeline_mode<synchronous>, transform_indices = @transform_6, window_bounds = array<i64: 1, 64>}, {pipeline_mode = #tpu.pipeline_mode<synchronous>, transform_indices = @transform_7, window_bounds = array<i64: 64, 12>}, {pipeline_mode = #tpu.pipeline_mode<synchronous>, transform_indices = @transform_8, window_bounds = array<i64: 1, 12>}, {transform_indices = @transform_9, window_bounds = array<i64: 16, 1>}, {transform_indices = @transform_10, window_bounds = array<i64: 16, 1>}]} {
    %c0 = arith.constant 0 : index
    %c0_0 = arith.constant 0 : index
    %0 = vector.load %arg1[%c0, %c0_0] : memref<16x8xf32, #tpu.memory_space<vmem>>, vector<16x8xf32>
    %c0_1 = arith.constant 0 : index
    %c0_2 = arith.constant 0 : index
    %1 = vector.load %arg2[%c0_1, %c0_2] : memref<16x8xf32, #tpu.memory_space<vmem>>, vector<16x8xf32>
    %c0_3 = arith.constant 0 : index
    %c0_4 = arith.constant 0 : index
    %2 = vector.load %arg3[%c0_3, %c0_4] : memref<16x4xf32, #tpu.memory_space<vmem>>, vector<16x4xf32>
    %c0_5 = arith.constant 0 : index
    %c0_6 = arith.constant 0 : index
    %3 = vector.load %arg4[%c0_5, %c0_6] : memref<8x64xf32, #tpu.memory_space<vmem>>, vector<8x64xf32>
    %cst = arith.constant dense<0.000000e+00> : vector<16x64xf32>
    %4 = tpu.matmul %0, %3, %cst {dimension_numbers = #tpu.dot_dimension_numbers<[1], [0], [0], [1], [0, 0, 1, 1], [], []>} : vector<16x8xf32>, vector<8x64xf32>, vector<16x64xf32> -> vector<16x64xf32>
    %c0_7 = arith.constant 0 : index
    %c0_8 = arith.constant 0 : index
    %5 = vector.load %arg5[%c0_7, %c0_8] : memref<4x64xf32, #tpu.memory_space<vmem>>, vector<4x64xf32>
    %cst_9 = arith.constant dense<0.000000e+00> : vector<16x64xf32>
    %6 = tpu.matmul %2, %5, %cst_9 {dimension_numbers = #tpu.dot_dimension_numbers<[1], [0], [0], [1], [0, 0, 1, 1], [], []>} : vector<16x4xf32>, vector<4x64xf32>, vector<16x64xf32> -> vector<16x64xf32>
    %7 = arith.addf %4, %6 : vector<16x64xf32>
    %c0_10 = arith.constant 0 : index
    %c0_11 = arith.constant 0 : index
    %8 = vector.load %arg6[%c0_10, %c0_11] : memref<8x64xf32, #tpu.memory_space<vmem>>, vector<8x64xf32>
    %cst_12 = arith.constant dense<0.000000e+00> : vector<16x64xf32>
    %9 = tpu.matmul %1, %8, %cst_12 {dimension_numbers = #tpu.dot_dimension_numbers<[1], [0], [0], [1], [0, 0, 1, 1], [], []>} : vector<16x8xf32>, vector<8x64xf32>, vector<16x64xf32> -> vector<16x64xf32>
    %10 = arith.addf %7, %9 : vector<16x64xf32>
    %c0_13 = arith.constant 0 : index
    %c0_14 = arith.constant 0 : index
    %11 = vector.load %arg7[%c0_13, %c0_14] : memref<1x64xf32, #tpu.memory_space<vmem>>, vector<1x64xf32>
    %12 = vector.broadcast %11 : vector<1x64xf32> to vector<16x64xf32>
    %13 = arith.addf %10, %12 : vector<16x64xf32>
    %14 = math.tanh %13 : vector<16x64xf32>
    %c0_15 = arith.constant 0 : index
    %c0_16 = arith.constant 0 : index
    %15 = vector.load %arg8[%c0_15, %c0_16] : memref<64x12xf32, #tpu.memory_space<vmem>>, vector<64x12xf32>
    %cst_17 = arith.constant dense<0.000000e+00> : vector<16x12xf32>
    %16 = tpu.matmul %14, %15, %cst_17 {dimension_numbers = #tpu.dot_dimension_numbers<[1], [0], [0], [1], [0, 0, 1, 1], [], []>} : vector<16x64xf32>, vector<64x12xf32>, vector<16x12xf32> -> vector<16x12xf32>
    %c0_18 = arith.constant 0 : index
    %c0_19 = arith.constant 0 : index
    %17 = vector.load %arg9[%c0_18, %c0_19] : memref<1x12xf32, #tpu.memory_space<vmem>>, vector<1x12xf32>
    %18 = vector.broadcast %17 : vector<1x12xf32> to vector<16x12xf32>
    %19 = arith.addf %16, %18 : vector<16x12xf32>
    %20 = vector.extract_strided_slice %19 {offsets = [0, 0], sizes = [16, 8], strides = [1, 1]} : vector<16x12xf32> to vector<16x8xf32>
    %21 = arith.subf %20, %1 : vector<16x8xf32>
    %22 = vector.extract_strided_slice %19 {offsets = [0, 8], sizes = [16, 4], strides = [1, 1]} : vector<16x12xf32> to vector<16x4xf32>
    %23 = arith.subf %22, %2 : vector<16x4xf32>
    %24 = arith.mulf %21, %21 : vector<16x8xf32>
    %cst_20 = arith.constant dense<0.000000e+00> : vector<16xf32>
    %25 = vector.multi_reduction <add>, %24, %cst_20 [1] : vector<16x8xf32> to vector<16xf32>
    %26 = vector.shape_cast %25 : vector<16xf32> to vector<16x1xf32>
    %c0_21 = arith.constant 0 : index
    %c0_22 = arith.constant 0 : index
    %27 = vector.load %arg10[%c0_21, %c0_22] : memref<16x1xf32, #tpu.memory_space<vmem>>, vector<16x1xf32>
    tpu.vector_store %arg10[%c0_21, %c0_22], %26 {strides = array<i32>} : memref<16x1xf32, #tpu.memory_space<vmem>>, vector<16x1xf32>,
    %28 = arith.mulf %23, %23 : vector<16x4xf32>
    %cst_23 = arith.constant dense<0.000000e+00> : vector<16xf32>
    %29 = vector.multi_reduction <add>, %28, %cst_23 [1] : vector<16x4xf32> to vector<16xf32>
    %30 = vector.shape_cast %29 : vector<16xf32> to vector<16x1xf32>
    %c0_24 = arith.constant 0 : index
    %c0_25 = arith.constant 0 : index
    %31 = vector.load %arg11[%c0_24, %c0_25] : memref<16x1xf32, #tpu.memory_space<vmem>>, vector<16x1xf32>
    tpu.vector_store %arg11[%c0_24, %c0_25], %30 {strides = array<i32>} : memref<16x1xf32, #tpu.memory_space<vmem>>, vector<16x1xf32>,
    return
  }
  func.func @transform_0(%arg0: i32) -> (i32, i32) {
    %c0_i32 = arith.constant 0 : i32
    %c0_i32_0 = arith.constant 0 : i32
    return %arg0, %c0_i32 : i32, i32
  }
  func.func @transform_1(%arg0: i32) -> (i32, i32) {
    %c0_i32 = arith.constant 0 : i32
    %c0_i32_0 = arith.constant 0 : i32
    return %arg0, %c0_i32 : i32, i32
  }
  func.func @transform_2(%arg0: i32) -> (i32, i32) {
    %c0_i32 = arith.constant 0 : i32
    %c0_i32_0 = arith.constant 0 : i32
    return %arg0, %c0_i32 : i32, i32
  }
  func.func @transform_3(%arg0: i32) -> (i32, i32) {
    %c0_i32 = arith.constant 0 : i32
    %c0_i32_0 = arith.constant 0 : i32
    %c0_i32_1 = arith.constant 0 : i32
    return %c0_i32, %c0_i32_0 : i32, i32
  }
  func.func @transform_4(%arg0: i32) -> (i32, i32) {
    %c0_i32 = arith.constant 0 : i32
    %c0_i32_0 = arith.constant 0 : i32
    %c0_i32_1 = arith.constant 0 : i32
    return %c0_i32, %c0_i32_0 : i32, i32
  }
  func.func @transform_5(%arg0: i32) -> (i32, i32) {
    %c0_i32 = arith.constant 0 : i32
    %c0_i32_0 = arith.constant 0 : i32
    %c0_i32_1 = arith.constant 0 : i32
    return %c0_i32, %c0_i32_0 : i32, i32
  }
  func.func @transform_6(%arg0: i32) -> (i32, i32) {
    %c0_i32 = arith.constant 0 : i32
    %c0_i32_0 = arith.constant 0 : i32
    %c0_i32_1 = arith.constant 0 : i32
    return %c0_i32, %c0_i32_0 : i32, i32
  }
  func.func @transform_7(%arg0: i32) -> (i32, i32) {
    %c0_i32 = arith.constant 0 : i32
    %c0_i32_0 = arith.constant 0 : i32
    %c0_i32_1 = arith.constant 0 : i32
    return %c0_i32, %c0_i32_0 : i32, i32
  }
  func.func @transform_8(%arg0: i32) -> (i32, i32) {
    %c0_i32 = arith.constant 0 : i32
    %c0_i32_0 = arith.constant 0 : i32
    %c0_i32_1 = arith.constant 0 : i32
    return %c0_i32, %c0_i32_0 : i32, i32
  }
  func.func @transform_9(%arg0: i32) -> (i32, i32) {
    %c0_i32 = arith.constant 0 : i32
    %c0_i32_0 = arith.constant 0 : i32
    return %arg0, %c0_i32 : i32, i32
  }
  func.func @transform_10(%arg0: i32) -> (i32, i32) {
    %c0_i32 = arith.constant 0 : i32
    %c0_i32_0 = arith.constant 0 : i32
    return %arg0, %c0_i32 : i32, i32
  }
}

</mosaic_0001>

<llo_original>
// kernel: mlp_fwd_bwd_dyn_loss.1
$region0: #{mlp_fwd_bwd_dyn_loss.1}
  #allocation0 [shape = 'u32[]', space=smem, size = 0x4, offset = 0x4, fixed_abs, tag = 'smem constant byte address 0x4 - core index']
  #allocation1 [shape = 'u32[144,128]{1,0:T(1,128)}', space=vmem, size = 0x12000, scoped, tag = 'internal scratch']
  %s0 = inlined_call_operand.vmem [shape: f32[16,8], index: 0, kind: input, shape index: {}]
  %s1 = inlined_call_operand.vmem [shape: f32[16,8], index: 1, kind: input, shape index: {}]
  %s2 = inlined_call_operand.vmem [shape: f32[16,4], index: 2, kind: input, shape index: {}]
  %s3 = inlined_call_operand.vmem [shape: f32[8,64], index: 3, kind: input, shape index: {}]
  %s4 = inlined_call_operand.vmem [shape: f32[4,64], index: 4, kind: input, shape index: {}]
  %s5 = inlined_call_operand.vmem [shape: f32[8,64], index: 5, kind: input, shape index: {}]
  %s6 = inlined_call_operand.vmem [shape: f32[1,64], index: 6, kind: input, shape index: {}]
  %s7 = inlined_call_operand.vmem [shape: f32[64,12], index: 7, kind: input, shape index: {}]
  %s8 = inlined_call_operand.vmem [shape: f32[1,12], index: 8, kind: input, shape index: {}]
  %s9 = inlined_call_operand.vmem [shape: f32[16,1], index: 9, kind: output, shape index: {0}]
  %s10 = inlined_call_operand.vmem [shape: f32[16,1], index: 10, kind: output, shape index: {1}]
  %11 = xla_tuple %s9, %s10
  %s12 = sld [smem:[#allocation0]]
  $region54: #{mlp_fwd_bwd_dyn_loss.1} parent=0
    _
  %s14 = ssub.s32 1, %s12
  %s15 = scalar_select 0, %s14, %s12
  // Predicated region
  $region2: #{mlp_fwd_bwd_dyn_loss.1} parent=0 // pred_check
    _
  $region3: #{mlp_fwd_bwd_dyn_loss.1} parent=0 // pred_check_branch
    %17 = sbr.rel (0) target = $region5
  $region4: #{mlp_fwd_bwd_dyn_loss.1} parent=0 // pred_region
    _
  $region5: #{mlp_fwd_bwd_dyn_loss.1} parent=0 // pred_fallthru
    _
  // Predicated region
  $region6: #{mlp_fwd_bwd_dyn_loss.1} parent=0 // pred_check
    _
  $region7: #{mlp_fwd_bwd_dyn_loss.1} parent=0 // pred_check_branch
    %19 = sbr.rel (0) target = $region9
  $region8: #{mlp_fwd_bwd_dyn_loss.1} parent=0 // pred_region
    _
  $region9: #{mlp_fwd_bwd_dyn_loss.1} parent=0 // pred_fallthru
    _
  // Predicated region
  $region10: #{mlp_fwd_bwd_dyn_loss.1} parent=0 // pred_check
    _
  $region11: #{mlp_fwd_bwd_dyn_loss.1} parent=0 // pred_check_branch
    %21 = sbr.rel (0) target = $region13
  $region12: #{mlp_fwd_bwd_dyn_loss.1} parent=0 // pred_region
    _
  $region13: #{mlp_fwd_bwd_dyn_loss.1} parent=0 // pred_fallthru
    _
  // Predicated region
  $region14: #{mlp_fwd_bwd_dyn_loss.1} parent=0 // pred_check
    _
  $region15: #{mlp_fwd_bwd_dyn_loss.1} parent=0 // pred_check_branch
    %23 = sbr.rel (0) target = $region17
  $region16: #{mlp_fwd_bwd_dyn_loss.1} parent=0 // pred_region
    _
  $region17: #{mlp_fwd_bwd_dyn_loss.1} parent=0 // pred_fallthru
    _
  // Predicated region
  $region18: #{mlp_fwd_bwd_dyn_loss.1} parent=0 // pred_check
    _
  $region19: #{mlp_fwd_bwd_dyn_loss.1} parent=0 // pred_check_branch
    %25 = sbr.rel (0) target = $region21
  $region20: #{mlp_fwd_bwd_dyn_loss.1} parent=0 // pred_region
    _
  $region21: #{mlp_fwd_bwd_dyn_loss.1} parent=0 // pred_fallthru
    _
  // Predicated region
  $region22: #{mlp_fwd_bwd_dyn_loss.1} parent=0 // pred_check
    _
  $region23: #{mlp_fwd_bwd_dyn_loss.1} parent=0 // pred_check_branch
    %27 = sbr.rel (0) target = $region25
  $region24: #{mlp_fwd_bwd_dyn_loss.1} parent=0 // pred_region
    _
  $region25: #{mlp_fwd_bwd_dyn_loss.1} parent=0 // pred_fallthru
    _
  // Predicated region
  $region26: #{mlp_fwd_bwd_dyn_loss.1} parent=0 // pred_check
    _
  $region27: #{mlp_fwd_bwd_dyn_loss.1} parent=0 // pred_check_branch
    %29 = sbr.rel (0) target = $region29
  $region28: #{mlp_fwd_bwd_dyn_loss.1} parent=0 // pred_region
    _
  $region29: #{mlp_fwd_bwd_dyn_loss.1} parent=0 // pred_fallthru
    _
  // Predicated region
  $region30: #{mlp_fwd_bwd_dyn_loss.1} parent=0 // pred_check
    _
  $region31: #{mlp_fwd_bwd_dyn_loss.1} parent=0 // pred_check_branch
    %31 = sbr.rel (0) target = $region33
  $region32: #{mlp_fwd_bwd_dyn_loss.1} parent=0 // pred_region
    _
  $region33: #{mlp_fwd_bwd_dyn_loss.1} parent=0 // pred_fallthru
    _
  // Predicated region
  $region34: #{mlp_fwd_bwd_dyn_loss.1} parent=0 // pred_check
    _
  $region35: #{mlp_fwd_bwd_dyn_loss.1} parent=0 // pred_check_branch
    %33 = sbr.rel (0) target = $region37
  $region36: #{mlp_fwd_bwd_dyn_loss.1} parent=0 // pred_region
    _
  $region37: #{mlp_fwd_bwd_dyn_loss.1} parent=0 // pred_fallthru
    _
  %v34 = vld [vmem:[%s0] sm:$0xff]
  %v35 = vld [vmem:[%s0 + $0x8] sm:$0xff]
  %v36 = vld [vmem:[%s1] sm:$0xff]
  %v37 = vld [vmem:[%s1 + $0x8] sm:$0xff]
  %v38 = vld [vmem:[%s2] sm:$0xff]
  %v39 = vld [vmem:[%s2 + $0x8] sm:$0xff]
  %v40 = vld [vmem:[%s3] sm:$0xff]
  %v41 = vld [vmem:[%s4] sm:$0xf]
  %vm42 = vcmask 31744
  %v44 = vsel %vm42, %v38, 0
  %v47 = vsel %vm42, %v39, 0
  %vm49 = vcmask 1043456
  %v51 = vsel %vm49, %v41, 0
  %53 = vmatprep.subr.mxu0 0.0
  %54 = vmatpush1.msra.mxu0 %v51
  %55 = vmatprep.subr.mxu0 0.0
  %56 = vmatpush1.msra.mxu0 0.0
  %57 = vmatprep.subr.mxu0 0.0
  %58 = vmatpush1.msra.mxu0 0.0
  %59 = vmatprep.subr.mxu0 0.0
  %60 = vmatpush1.msra.mxu0 0.0
  %61 = vmatprep.subr.mxu0 0.0
  %62 = vmatpush1.msra.mxu0 0.0
  %63 = vmatprep.subr.mxu0 0.0
  %64 = vmatpush1.msra.mxu0 0.0
  %65 = vmatprep.subr.mxu0 0.0
  %66 = vmatpush1.msra.mxu0 0.0
  %67 = vmatprep.subr.mxu0 0.0
  %68 = vmatpush1.msra.mxu0 0.0
  %69 = vmatprep.subr.mxu0 0.0
  %70 = vmatpush1.msra.mxu0 0.0
  %71 = vmatprep.subr.mxu0 0.0
  %72 = vmatpush1.msra.mxu0 0.0
  %73 = vmatprep.subr.mxu0 0.0
  %74 = vmatpush1.msra.mxu0 0.0
  %75 = vmatprep.subr.mxu0 0.0
  %76 = vmatpush1.msra.mxu0 0.0
  %77 = vmatprep.subr.mxu0 0.0
  %78 = vmatpush1.msra.mxu0 0.0
  %79 = vmatprep.subr.mxu0 0.0
  %80 = vmatpush1.msra.mxu0 0.0
  %81 = vmatprep.subr.mxu0 0.0
  %82 = vmatpush1.msra.mxu0 0.0
  %83 = vmatprep.subr.mxu0 0.0
  %84 = vmatpush1.msra.mxu0 0.0
  %85 = vmatprep.subr.mxu0 0.0
  %86 = vmatpush1.msra.mxu0 0.0
  %87 = vmatprep.subr.mxu0 0.0
  %88 = vmatpush1.msra.mxu0 0.0
  %89 = vmatprep.subr.mxu0 0.0
  %90 = vmatpush1.msra.mxu0 0.0
  %91 = vmatprep.subr.mxu0 0.0
  %92 = vmatpush1.msra.mxu0 0.0
  %93 = vmatprep.subr.mxu0 0.0
  %94 = vmatpush1.msra.mxu0 0.0
  %95 = vmatprep.subr.mxu0 0.0
  %96 = vmatpush1.msra.mxu0 0.0
  %97 = vmatprep.subr.mxu0 0.0
  %98 = vmatpush1.msra.mxu0 0.0
  %99 = vmatprep.subr.mxu0 0.0
  %100 = vmatpush1.msra.mxu0 0.0
  %101 = vmatprep.subr.mxu0 0.0
  %102 = vmatpush1.msra.mxu0 0.0
  %103 = vmatprep.subr.mxu0 0.0
  %104 = vmatpush1.msra.mxu0 0.0
  %105 = vmatprep.subr.mxu0 0.0
  %106 = vmatpush1.msra.mxu0 0.0
  %107 = vmatprep.subr.mxu0 0.0
  %108 = vmatpush1.msra.mxu0 0.0
  %109 = vmatprep.subr.mxu0 0.0
  %110 = vmatpush1.msra.mxu0 0.0
  %111 = vmatprep.subr.mxu0 0.0
  %112 = vmatpush1.msra.mxu0 0.0
  %113 = vmatprep.subr.mxu0 0.0
  %114 = vmatpush1.msra.mxu0 0.0
  %115 = vmatprep.subr.mxu0 0.0
  %116 = vmatpush1.msra.mxu0 0.0
  %117 = vmatprep.mubr.f32.mxu0 0.0
  %118 = vmatmul.mubr.f32.gmra.mrb[0].mxu0 %v44
  %v119 = vpop.f32.mrb[0].mxu0
  %v120 = vadd.f32 0.0, %v119
  %v121 = vpop.f32.mrb[0].mxu0
  %122 = vmatprep.mubr.f32.mxu0 0.0
  %123 = vmatmul.mubr.f32.gmra.mrb[0].mxu0 %v47
  %v124 = vpop.f32.mrb[0].mxu0
  %v125 = vadd.f32 0.0, %v124
  %v126 = vpop.f32.mrb[0].mxu0
  %127 = vdwg.mxu0
  %vm128 = vcmask 64512
  %v130 = vsel %vm128, %v34, 0
  %v133 = vsel %vm128, %v35, 0
  %135 = vmatprep.subr.mxu0 0.0
  %136 = vmatpush1.msra.mxu0 %v40
  %137 = vmatprep.subr.mxu0 0.0
  %138 = vmatpush1.msra.mxu0 0.0
  %139 = vmatprep.subr.mxu0 0.0
  %140 = vmatpush1.msra.mxu0 0.0
  %141 = vmatprep.subr.mxu0 0.0
  %142 = vmatpush1.msra.mxu0 0.0
  %143 = vmatprep.subr.mxu0 0.0
  %144 = vmatpush1.msra.mxu0 0.0
  %145 = vmatprep.subr.mxu0 0.0
  %146 = vmatpush1.msra.mxu0 0.0
  %147 = vmatprep.subr.mxu0 0.0
  %148 = vmatpush1.msra.mxu0 0.0
  %149 = vmatprep.subr.mxu0 0.0
  %150 = vmatpush1.msra.mxu0 0.0
  %151 = vmatprep.subr.mxu0 0.0
  %152 = vmatpush1.msra.mxu0 0.0
  %153 = vmatprep.subr.mxu0 0.0
  %154 = vmatpush1.msra.mxu0 0.0
  %155 = vmatprep.subr.mxu0 0.0
  %156 = vmatpush1.msra.mxu0 0.0
  %157 = vmatprep.subr.mxu0 0.0
  %158 = vmatpush1.msra.mxu0 0.0
  %159 = vmatprep.subr.mxu0 0.0
  %160 = vmatpush1.msra.mxu0 0.0
  %161 = vmatprep.subr.mxu0 0.0
  %162 = vmatpush1.msra.mxu0 0.0
  %163 = vmatprep.subr.mxu0 0.0
  %164 = vmatpush1.msra.mxu0 0.0
  %165 = vmatprep.subr.mxu0 0.0
  %166 = vmatpush1.msra.mxu0 0.0
  %167 = vmatprep.subr.mxu0 0.0
  %168 = vmatpush1.msra.mxu0 0.0
  %169 = vmatprep.subr.mxu0 0.0
  %170 = vmatpush1.msra.mxu0 0.0
  %171 = vmatprep.subr.mxu0 0.0
  %172 = vmatpush1.msra.mxu0 0.0
  %173 = vmatprep.subr.mxu0 0.0
  %174 = vmatpush1.msra.mxu0 0.0
  %175 = vmatprep.subr.mxu0 0.0
  %176 = vmatpush1.msra.mxu0 0.0
  %177 = vmatprep.subr.mxu0 0.0
  %178 = vmatpush1.msra.mxu0 0.0
  %179 = vmatprep.subr.mxu0 0.0
  %180 = vmatpush1.msra.mxu0 0.0
  %181 = vmatprep.subr.mxu0 0.0
  %182 = vmatpush1.msra.mxu0 0.0
  %183 = vmatprep.subr.mxu0 0.0
  %184 = vmatpush1.msra.mxu0 0.0
  %185 = vmatprep.subr.mxu0 0.0
  %186 = vmatpush1.msra.mxu0 0.0
  %187 = vmatprep.subr.mxu0 0.0
  %188 = vmatpush1.msra.mxu0 0.0
  %189 = vmatprep.subr.mxu0 0.0
  %190 = vmatpush1.msra.mxu0 0.0
  %191 = vmatprep.subr.mxu0 0.0
  %192 = vmatpush1.msra.mxu0 0.0
  %193 = vmatprep.subr.mxu0 0.0
  %194 = vmatpush1.msra.mxu0 0.0
  %195 = vmatprep.subr.mxu0 0.0
  %196 = vmatpush1.msra.mxu0 0.0
  %197 = vmatprep.subr.mxu0 0.0
  %198 = vmatpush1.msra.mxu0 0.0
  %199 = vmatprep.mubr.f32.mxu0 0.0
  %200 = vmatmul.mubr.f32.gmra.mrb[0].mxu0 %v130
  %v201 = vpop.f32.mrb[0].mxu0
  %v202 = vadd.f32 %v120, %v201
  %v203 = vpop.f32.mrb[0].mxu0
  %204 = vmatprep.mubr.f32.mxu0 0.0
  %205 = vmatmul.mubr.f32.gmra.mrb[0].mxu0 %v133
  %v206 = vpop.f32.mrb[0].mxu0
  %v207 = vadd.f32 %v125, %v206
  %v208 = vpop.f32.mrb[0].mxu0
  %209 = vdwg.mxu0
  %v210 = vld [vmem:[%s5] sm:$0xff]
  %v212 = vsel %vm128, %v36, 0
  %v215 = vsel %vm128, %v37, 0
  %217 = vmatprep.subr.mxu0 0.0
  %218 = vmatpush1.msra.mxu0 %v210
  %219 = vmatprep.subr.mxu0 0.0
  %220 = vmatpush1.msra.mxu0 0.0
  %221 = vmatprep.subr.mxu0 0.0
  %222 = vmatpush1.msra.mxu0 0.0
  %223 = vmatprep.subr.mxu0 0.0
  %224 = vmatpush1.msra.mxu0 0.0
  %225 = vmatprep.subr.mxu0 0.0
  %226 = vmatpush1.msra.mxu0 0.0
  %227 = vmatprep.subr.mxu0 0.0
  %228 = vmatpush1.msra.mxu0 0.0
  %229 = vmatprep.subr.mxu0 0.0
  %230 = vmatpush1.msra.mxu0 0.0
  %231 = vmatprep.subr.mxu0 0.0
  %232 = vmatpush1.msra.mxu0 0.0
  %233 = vmatprep.subr.mxu0 0.0
  %234 = vmatpush1.msra.mxu0 0.0
  %235 = vmatprep.subr.mxu0 0.0
  %236 = vmatpush1.msra.mxu0 0.0
  %237 = vmatprep.subr.mxu0 0.0
  %238 = vmatpush1.msra.mxu0 0.0
  %239 = vmatprep.subr.mxu0 0.0
  %240 = vmatpush1.msra.mxu0 0.0
  %241 = vmatprep.subr.mxu0 0.0
  %242 = vmatpush1.msra.mxu0 0.0
  %243 = vmatprep.subr.mxu0 0.0
  %244 = vmatpush1.msra.mxu0 0.0
  %245 = vmatprep.subr.mxu0 0.0
  %246 = vmatpush1.msra.mxu0 0.0
  %247 = vmatprep.subr.mxu0 0.0
  %248 = vmatpush1.msra.mxu0 0.0
  %249 = vmatprep.subr.mxu0 0.0
  %250 = vmatpush1.msra.mxu0 0.0
  %251 = vmatprep.subr.mxu0 0.0
  %252 = vmatpush1.msra.mxu0 0.0
  %253 = vmatprep.subr.mxu0 0.0
  %254 = vmatpush1.msra.mxu0 0.0
  %255 = vmatprep.subr.mxu0 0.0
  %256 = vmatpush1.msra.mxu0 0.0
  %257 = vmatprep.subr.mxu0 0.0
  %258 = vmatpush1.msra.mxu0 0.0
  %259 = vmatprep.subr.mxu0 0.0
  %260 = vmatpush1.msra.mxu0 0.0
  %261 = vmatprep.subr.mxu0 0.0
  %262 = vmatpush1.msra.mxu0 0.0
  %263 = vmatprep.subr.mxu0 0.0
  %264 = vmatpush1.msra.mxu0 0.0
  %265 = vmatprep.subr.mxu0 0.0
  %266 = vmatpush1.msra.mxu0 0.0
  %267 = vmatprep.subr.mxu0 0.0
  %268 = vmatpush1.msra.mxu0 0.0
  %269 = vmatprep.subr.mxu0 0.0
  %270 = vmatpush1.msra.mxu0 0.0
  %271 = vmatprep.subr.mxu0 0.0
  %272 = vmatpush1.msra.mxu0 0.0
  %273 = vmatprep.subr.mxu0 0.0
  %274 = vmatpush1.msra.mxu0 0.0
  %275 = vmatprep.subr.mxu0 0.0
  %276 = vmatpush1.msra.mxu0 0.0
  %277 = vmatprep.subr.mxu0 0.0
  %278 = vmatpush1.msra.mxu0 0.0
  %279 = vmatprep.subr.mxu0 0.0
  %280 = vmatpush1.msra.mxu0 0.0
  %281 = vmatprep.mubr.f32.mxu0 0.0
  %282 = vmatmul.mubr.f32.gmra.mrb[0].mxu0 %v212
  %v283 = vpop.f32.mrb[0].mxu0
  %v284 = vadd.f32 0.0, %v283
  %v285 = vpop.f32.mrb[0].mxu0
  %286 = vmatprep.mubr.f32.mxu0 0.0
  %287 = vmatmul.mubr.f32.gmra.mrb[0].mxu0 %v215
  %v288 = vpop.f32.mrb[0].mxu0
  %v289 = vadd.f32 0.0, %v288
  %v290 = vpop.f32.mrb[0].mxu0
  %291 = vdwg.mxu0
  %v292 = vadd.f32 %v202, %v284
  %v293 = vadd.f32 %v207, %v289
  %v294 = vld [vmem:[%s6] sm:$0x1]
  %v296 = vlaneseq
  %v297 = vshrl.u32 %v296, 7
  %v298 = vsub.s32 0, %v297
  %v299 = vrot.slane %v294, %v298
  %v301 = vadd.f32 %v292, %v299
  %v302 = vadd.f32 %v293, %v299
  %v303 = vtanh.pop %v301
  %v304 = vtanh.pop %v302
  %v305 = vld [vmem:[%s7] sm:$0xff]
  %v306 = vld [vmem:[%s7 + $0x8] sm:$0xff]
  %v307 = vld [vmem:[%s7 + $0x10] sm:$0xff]
  %v308 = vld [vmem:[%s7 + $0x18] sm:$0xff]
  %v309 = vld [vmem:[%s7 + $0x20] sm:$0xff]
  %v310 = vld [vmem:[%s7 + $0x28] sm:$0xff]
  %v311 = vld [vmem:[%s7 + $0x30] sm:$0xff]
  %v312 = vld [vmem:[%s7 + $0x38] sm:$0xff]
  %v313 = vld [vmem:[%s8] sm:$0x1]
  %v315 = vlaneseq
  %v316 = vshrl.u32 %v315, 7
  %v317 = vsub.s32 0, %v316
  %v318 = vrot.slane %v313, %v317
  %vm320 = vcmask 523264
  %v322 = vsel %vm320, %v303, 0
  %v325 = vsel %vm320, %v304, 0
  %327 = vmatprep.subr.mxu0 0.0
  %328 = vmatpush1.msra.mxu0 %v305
  %329 = vmatprep.subr.mxu0 0.0
  %330 = vmatpush1.msra.mxu0 %v306
  %331 = vmatprep.subr.mxu0 0.0
  %332 = vmatpush1.msra.mxu0 %v307
  %333 = vmatprep.subr.mxu0 0.0
  %334 = vmatpush1.msra.mxu0 %v308
  %335 = vmatprep.subr.mxu0 0.0
  %336 = vmatpush1.msra.mxu0 %v309
  %337 = vmatprep.subr.mxu0 0.0
  %338 = vmatpush1.msra.mxu0 %v310
  %339 = vmatprep.subr.mxu0 0.0
  %340 = vmatpush1.msra.mxu0 %v311
  %341 = vmatprep.subr.mxu0 0.0
  %342 = vmatpush1.msra.mxu0 %v312
  %343 = vmatprep.subr.mxu0 0.0
  %344 = vmatpush1.msra.mxu0 0.0
  %345 = vmatprep.subr.mxu0 0.0
  %346 = vmatpush1.msra.mxu0 0.0
  %347 = vmatprep.subr.mxu0 0.0
  %348 = vmatpush1.msra.mxu0 0.0
  %349 = vmatprep.subr.mxu0 0.0
  %350 = vmatpush1.msra.mxu0 0.0
  %351 = vmatprep.subr.mxu0 0.0
  %352 = vmatpush1.msra.mxu0 0.0
  %353 = vmatprep.subr.mxu0 0.0
  %354 = vmatpush1.msra.mxu0 0.0
  %355 = vmatprep.subr.mxu0 0.0
  %356 = vmatpush1.msra.mxu0 0.0
  %357 = vmatprep.subr.mxu0 0.0
  %358 = vmatpush1.msra.mxu0 0.0
  %359 = vmatprep.subr.mxu0 0.0
  %360 = vmatpush1.msra.mxu0 0.0
  %361 = vmatprep.subr.mxu0 0.0
  %362 = vmatpush1.msra.mxu0 0.0
  %363 = vmatprep.subr.mxu0 0.0
  %364 = vmatpush1.msra.mxu0 0.0
  %365 = vmatprep.subr.mxu0 0.0
  %366 = vmatpush1.msra.mxu0 0.0
  %367 = vmatprep.subr.mxu0 0.0
  %368 = vmatpush1.msra.mxu0 0.0
  %369 = vmatprep.subr.mxu0 0.0
  %370 = vmatpush1.msra.mxu0 0.0
  %371 = vmatprep.subr.mxu0 0.0
  %372 = vmatpush1.msra.mxu0 0.0
  %373 = vmatprep.subr.mxu0 0.0
  %374 = vmatpush1.msra.mxu0 0.0
  %375 = vmatprep.subr.mxu0 0.0
  %376 = vmatpush1.msra.mxu0 0.0
  %377 = vmatprep.subr.mxu0 0.0
  %378 = vmatpush1.msra.mxu0 0.0
  %379 = vmatprep.subr.mxu0 0.0
  %380 = vmatpush1.msra.mxu0 0.0
  %381 = vmatprep.subr.mxu0 0.0
  %382 = vmatpush1.msra.mxu0 0.0
  %383 = vmatprep.subr.mxu0 0.0
  %384 = vmatpush1.msra.mxu0 0.0
  %385 = vmatprep.subr.mxu0 0.0
  %386 = vmatpush1.msra.mxu0 0.0
  %387 = vmatprep.subr.mxu0 0.0
  %388 = vmatpush1.msra.mxu0 0.0
  %389 = vmatprep.subr.mxu0 0.0
  %390 = vmatpush1.msra.mxu0 0.0
  %391 = vmatprep.mubr.f32.mxu0 0.0
  %392 = vmatmul.mubr.f32.gmra.mrb[0].mxu0 %v322
  %v393 = vpop.f32.mrb[0].mxu0
  %v394 = vadd.f32 %v318, %v393
  %v395 = vpop.f32.mrb[0].mxu0
  %396 = vmatprep.mubr.f32.mxu0 0.0
  %397 = vmatmul.mubr.f32.gmra.mrb[0].mxu0 %v325
  %v398 = vpop.f32.mrb[0].mxu0
  %v399 = vadd.f32 %v318, %v398
  %v400 = vpop.f32.mrb[0].mxu0
  %401 = vdwg.mxu0
  %v402 = vsub.f32 %v394, %v36
  %v403 = vsub.f32 %v399, %v37
  %404 = vrot.lane.b32.xlu0 %v38, 8
  %v405 = vpop.permute.xlu0 %404
  %406 = vrot.lane.b32.xlu0 %v39, 8
  %v407 = vpop.permute.xlu0 %406
  %v410 = vsub.f32 %v394, %v405
  %v411 = vsub.f32 %v399, %v407
  %v412 = vmul.f32 %v402, %v402
  %v413 = vmul.f32 %v403, %v403
  %v414 = vsel %vm128, %v412, 0.0
  %415 = vadd.xlane.f32.xlu0 %v414
  %v416 = vpop.xlane.xlu0 %415
  %v417 = vsel %vm128, %v413, 0.0
  %418 = vadd.xlane.f32.xlu0 %v417
  %v419 = vpop.xlane.xlu0 %418
  %vm420 = vcmask 7168
  %421 = vst.msk [vmem:[%s9] sm:$0xff] %vm420, %v416
  %422 = vst.msk [vmem:[%s9 + $0x8] sm:$0xff] %vm420, %v419
  %v423 = vmul.f32 %v410, %v410
  %v424 = vmul.f32 %v411, %v411
  %427 = vrot.lane.b32.xlu0 %v423, 120
  %v428 = vpop.permute.xlu0 %427
  %429 = vrot.lane.b32.xlu0 %v424, 120
  %v430 = vpop.permute.xlu0 %429
  %v433 = vsel %vm42, %v428, 0.0
  %434 = vadd.xlane.f32.xlu0 %v433
  %v435 = vpop.xlane.xlu0 %434
  %v436 = vsel %vm42, %v430, 0.0
  %437 = vadd.xlane.f32.xlu0 %v436
  %v438 = vpop.xlane.xlu0 %437
  %439 = vst.msk [vmem:[%s10] sm:$0xff] %vm420, %v435
  %440 = vst.msk [vmem:[%s10 + $0x8] sm:$0xff] %vm420, %v438
  // Predicated region
  $region38: #{mlp_fwd_bwd_dyn_loss.1} parent=0 // pred_check
    _
  $region39: #{mlp_fwd_bwd_dyn_loss.1} parent=0 // pred_check_branch
    %442 = sbr.rel (0) target = $region41
  $region40: #{mlp_fwd_bwd_dyn_loss.1} parent=0 // pred_region
    _
  $region41: #{mlp_fwd_bwd_dyn_loss.1} parent=0 // pred_fallthru
    _
  // Predicated region
  $region42: #{mlp_fwd_bwd_dyn_loss.1} parent=0 // pred_check
    _
  $region43: #{mlp_fwd_bwd_dyn_loss.1} parent=0 // pred_check_branch
    %444 = sbr.rel (0) target = $region45
  $region44: #{mlp_fwd_bwd_dyn_loss.1} parent=0 // pred_region
    _
  $region45: #{mlp_fwd_bwd_dyn_loss.1} parent=0 // pred_fallthru
    _
  // Predicated region
  $region46: #{mlp_fwd_bwd_dyn_loss.1} parent=0 // pred_check
    _
  $region47: #{mlp_fwd_bwd_dyn_loss.1} parent=0 // pred_check_branch
    %446 = sbr.rel (0) target = $region49
  $region48: #{mlp_fwd_bwd_dyn_loss.1} parent=0 // pred_region
    _
  $region49: #{mlp_fwd_bwd_dyn_loss.1} parent=0 // pred_fallthru
    _
  // Predicated region
  $region50: #{mlp_fwd_bwd_dyn_loss.1} parent=0 // pred_check
    _
  $region51: #{mlp_fwd_bwd_dyn_loss.1} parent=0 // pred_check_branch
    %448 = sbr.rel (0) target = $region53
  $region52: #{mlp_fwd_bwd_dyn_loss.1} parent=0 // pred_region
    _
  $region53: #{mlp_fwd_bwd_dyn_loss.1} parent=0 // pred_fallthru
    _

</llo_original>
